<compile_context>
chip_gen: v7x
topology: tpu7x:2x2x1
jax: 0.10.0
libtpu: 0.0.40
codegen_flags: <defaults>
</compile_context>

<pallas_src>
import numpy as np
import jax
import jax.numpy as jnp
from jax.experimental import pallas as pl
from jax.experimental.pallas import tpu as pltpu


def build_grid(resolution):
    """Same semantics as the PyTorch build_grid: (1, H, W, 4) float32."""
    ranges = [np.linspace(0.0, 1.0, num=res) for res in resolution]
    grid = np.meshgrid(*ranges, sparse=False, indexing="ij")
    grid = np.stack(grid, axis=-1)
    grid = np.reshape(grid, [resolution[0], resolution[1], -1])
    grid = np.expand_dims(grid, axis=0).astype(np.float32)
    return np.concatenate([grid, 1.0 - grid], axis=-1)  # (1, H, W, 4)


def _round_up(x, m):
    return ((x + m - 1) // m) * m


# ---------------------------------------------------------------------------
# Hot kernel: lane-dense broadcast add   out = x + emb
# ---------------------------------------------------------------------------
def _add_embed_kernel(emb_ref, x_ref, o_ref):
    # emb_ref: (1, tl)   x_ref: (B, tl)   o_ref: (B, tl)
    # Sublane-broadcast of the shared embedding row over the batch rows,
    # with a dtype-safe store (works for f32 and bf16 inputs).
    o_ref[...] = (x_ref[...] + emb_ref[...]).astype(o_ref.dtype)


def _select_lane_tile(L, B, itemsize, max_block_bytes, min_row_bytes=2048):
    """Fixed lane tile (multiple of 128); the grid uses pl.cdiv, so a ragged
    last block is fine.  No divisor search -> no 128-lane collapse."""
    tl = max_block_bytes // max(1, B * itemsize)
    tl = max(tl, min_row_bytes // itemsize)        # per-row DMA segments >= ~2 KiB
    tl = max(128, (tl // 128) * 128)
    tl = min(tl, _round_up(L, 128))
    # Guarantee >= 2 grid steps when there is enough work so the "parallel"
    # axis actually distributes across both v7x TensorCores.
    if pl.cdiv(L, tl) < 2 and L > 128:
        tl = max(128, _round_up(pl.cdiv(L, 2), 128))
    return tl


def compute_position_embedding(grid, weight, bias, dtype):
    """Batch-invariant  emb = grid @ W + b, flattened to (1, H*W*C).

    Tiny K=4 contraction -> one XLA fusion.  It depends only on
    (grid, weight, bias), so callers doing many forwards should compute it
    once and pass it via `emb_flat=` to soft_position_embed.
    """
    _, H, W, _ = grid.shape
    C = weight.shape[1]
    grid_flat = grid.reshape(H * W, 4)
    emb = jnp.dot(grid_flat, weight, preferred_element_type=jnp.float32) + bias
    return emb.astype(dtype).reshape(1, H * W * C)


def soft_position_embed(inputs, grid, weight, bias, *, emb_flat=None,
                        max_block_bytes=2 << 20):
    """SoftPositionEmbed.forward:  inputs + (grid @ W + b).

    inputs: (B, H, W, C); grid: (1, H, W, 4); weight: (4, C); bias: (C,).
    """
    B, H, W, C = inputs.shape
    L = H * W * C

    # (1) Positional embedding (batch invariant), computed/cached outside the
    #     hot kernel and stored in the input dtype (halves its HBM read for bf16).
    if emb_flat is None:
        emb_flat = compute_position_embedding(grid, weight, bias, inputs.dtype)

    # (2) Lane-dense flattened broadcast add — the only HBM-heavy work.
    x_flat = inputs.reshape(B, L)
    itemsize = jnp.dtype(inputs.dtype).itemsize
    tl = _select_lane_tile(L, B, itemsize, max_block_bytes)
    n_tiles = pl.cdiv(L, tl)

    # Double-buffered x block + out block + shared emb block, with headroom.
    vmem_needed = 2 * (2 * B * tl + tl) * itemsize
    vmem_limit = int(min(max(2 * vmem_needed, 8 << 20), 32 << 20))

    out_flat = pl.pallas_call(
        _add_embed_kernel,
        out_shape=jax.ShapeDtypeStruct((B, L), inputs.dtype),
        grid_spec=pltpu.PrefetchScalarGridSpec(
            num_scalar_prefetch=0,
            grid=(n_tiles,),
            in_specs=[
                pl.BlockSpec((1, tl), lambda j: (0, j)),   # shared embedding slice
                pl.BlockSpec((B, tl), lambda j: (0, j)),   # per-batch features
            ],
            out_specs=pl.BlockSpec((B, tl), lambda j: (0, j)),
        ),
        compiler_params=pltpu.CompilerParams(
            dimension_semantics=("parallel",),
            vmem_limit_bytes=vmem_limit),
    )(emb_flat, x_flat)

    return out_flat.reshape(B, H, W, C)


if __name__ == "__main__":
    # hidden_size = 32, resolution = (16, 16), batch = 2, channels-last NHWC.
    B, H, W, C = 2, 16, 16, 32
    key = jax.random.PRNGKey(0)
    k_in, k_w, k_b = jax.random.split(key, 3)

    inputs = jax.random.normal(k_in, (B, H, W, C), dtype=jnp.float32)

    # nn.Linear(4, hidden_size) parameters, deterministic PyTorch-style init.
    bound = 1.0 / np.sqrt(4.0)
    weight = jax.random.uniform(k_w, (4, C), dtype=jnp.float32,
                                minval=-bound, maxval=bound)   # stored as (in, out)
    bias = jax.random.uniform(k_b, (C,), dtype=jnp.float32,
                              minval=-bound, maxval=bound)

    grid = jnp.asarray(build_grid((H, W)))  # (1, H, W, 4)

    fwd = jax.jit(soft_position_embed)
    out = jax.block_until_ready(fwd(inputs, grid, weight, bias))

    # Reference check in plain JAX.
    ref = inputs + (jnp.einsum("bhwk,kc->bhwc", grid, weight) + bias)
    np.testing.assert_allclose(np.asarray(out), np.asarray(ref),
                               rtol=1e-5, atol=1e-5)
    print("KERNEL_OK")
</pallas_src>

<mosaic_0001>
module attributes {stable_mosaic.version = 11 : i64} {
  func.func @_add_embed_kernel(%arg0: i32, %arg1: memref<1x4096xf32, #tpu.memory_space<vmem>>, %arg2: memref<2x4096xf32, #tpu.memory_space<vmem>>, %arg3: memref<2x4096xf32, #tpu.memory_space<vmem>>) attributes {dimension_semantics = [#tpu.dimension_semantics<parallel>], iteration_bounds = array<i64: 2>, scalar_prefetch = 0 : i64, scratch_operands = 0 : i64, tpu.core_type = #tpu.core_type<tc>, window_params = [{transform_indices = @transform_0, window_bounds = array<i64: 1, 4096>}, {transform_indices = @transform_1, window_bounds = array<i64: 2, 4096>}, {transform_indices = @transform_2, window_bounds = array<i64: 2, 4096>}]} {
    %c0 = arith.constant 0 : index
    %c0_0 = arith.constant 0 : index
    %0 = vector.load %arg2[%c0, %c0_0] : memref<2x4096xf32, #tpu.memory_space<vmem>>, vector<2x4096xf32>
    %c0_1 = arith.constant 0 : index
    %c0_2 = arith.constant 0 : index
    %1 = vector.load %arg1[%c0_1, %c0_2] : memref<1x4096xf32, #tpu.memory_space<vmem>>, vector<1x4096xf32>
    %2 = vector.broadcast %1 : vector<1x4096xf32> to vector<2x4096xf32>
    %3 = arith.addf %0, %2 : vector<2x4096xf32>
    %c0_3 = arith.constant 0 : index
    %c0_4 = arith.constant 0 : index
    %4 = vector.load %arg3[%c0_3, %c0_4] : memref<2x4096xf32, #tpu.memory_space<vmem>>, vector<2x4096xf32>
    tpu.vector_store %arg3[%c0_3, %c0_4], %3 {strides = array<i32>} : memref<2x4096xf32, #tpu.memory_space<vmem>>, vector<2x4096xf32>,
    return
  }
  func.func @transform_0(%arg0: i32) -> (i32, i32) {
    %c0_i32 = arith.constant 0 : i32
    %c0_i32_0 = arith.constant 0 : i32
    return %c0_i32, %arg0 : i32, i32
  }
  func.func @transform_1(%arg0: i32) -> (i32, i32) {
    %c0_i32 = arith.constant 0 : i32
    %c0_i32_0 = arith.constant 0 : i32
    return %c0_i32, %arg0 : i32, i32
  }
  func.func @transform_2(%arg0: i32) -> (i32, i32) {
    %c0_i32 = arith.constant 0 : i32
    %c0_i32_0 = arith.constant 0 : i32
    return %c0_i32, %arg0 : i32, i32
  }
}

</mosaic_0001>

<llo_original>
// kernel: soft_position_embed.1
$region0: #{soft_position_embed.1}
  #allocation0 [shape = 'u32[]', space=smem, size = 0x4, offset = 0x4, fixed_abs, tag = 'smem constant byte address 0x4 - core index']
  #allocation1 [shape = 'u32[144,128]{1,0:T(1,128)}', space=vmem, size = 0x12000, scoped, tag = 'internal scratch']
  %s0 = inlined_call_operand.vmem [shape: f32[1,8192], index: 0, kind: input, shape index: {}]
  %s1 = inlined_call_operand.vmem [shape: f32[2,8192], index: 1, kind: input, shape index: {}]
  %s2 = inlined_call_operand.vmem [shape: f32[2,8192], index: 2, kind: output, shape index: {}]
  %s3 = sld [smem:[#allocation0]]
  $region41: #{soft_position_embed.1} parent=0
    _
  %s5 = ssub.s32 1, %s3
  %s6 = scalar_select 0, %s5, %s3
  loop: start=0, step=1, limit=4
  $region2: #{soft_position_embed.1} parent=0 // loop_pre_header
    _
  $region3: #{soft_position_embed.1} parent=0 // loop_header
    %s8 = sphi 0, %s12
    %p9 = scmp.ge.s32.totalorder %s8, 4
    %s18 = sphi 0, %s20
    %s21 = sphi 0, %s18
    %s22 = sphi 0, %s21
    %s38 = sphi 0, %s22
    %s44 = sphi 0, %s46
    %s47 = sphi 0, %s44
    %s48 = sphi 0, %s47
    %s64 = sphi 0, %s48
    %s70 = sphi 0, %s72
    %s73 = sphi 0, %s70
    %s74 = sphi 0, %s73
    %s90 = sphi 0, %s74
  $region4: #{soft_position_embed.1} parent=0 // loop_header_branch
    %11 = sbr.rel (%p9) target = $region8
  $region5: #{soft_position_embed.1} parent=0 // loop_body
    %s13 = ssub.s32 %s8, 1
    %s14 = ssub.s32 %s8, 2
    %s15 = sadd.s32 %s8, 1
    %s16 = ssub.s32 %s8, %s15
    %p17 = scmp.eq.s32.totalorder %s16, 0
    %s19 = sadd.s32 %s18, 1
    %s20 = scalar_select %p17, %s18, %s19
    %p23 = pneg %p17
    %p24 = scmp.eq.s32.totalorder %s8, 1
    %p25 = por %p23, %p24
    %p26 = scmp.ne.s32.totalorder %s18, %s21
    %p27 = scmp.eq.s32.totalorder %s8, 0
    %p28 = por %p26, %p27
    %p29 = scmp.ne.s32.totalorder %s18, %s21
    %p30 = scmp.eq.s32.totalorder %s13, 1
    %p31 = por %p29, %p30
    %p32 = scmp.ne.s32.totalorder %s21, %s22
    %p33 = scmp.eq.s32.totalorder %s13, 0
    %p34 = por %p32, %p33
    %p35 = scmp.ne.s32.totalorder %s21, %s22
    %p36 = scmp.eq.s32.totalorder %s14, 1
    %p37 = por %p35, %p36
    %p39 = scmp.ne.s32.totalorder %s22, %s38
    %p40 = scmp.eq.s32.totalorder %s14, 0
    %p41 = por %p39, %p40
    %s42 = ssub.s32 %s8, %s15
    %p43 = scmp.eq.s32.totalorder %s42, 0
    %s45 = sadd.s32 %s44, 1
    %s46 = scalar_select %p43, %s44, %s45
    %p49 = pneg %p43
    %p50 = scmp.eq.s32.totalorder %s8, 1
    %p51 = por %p49, %p50
    %p52 = scmp.ne.s32.totalorder %s44, %s47
    %p53 = scmp.eq.s32.totalorder %s8, 0
    %p54 = por %p52, %p53
    %p55 = scmp.ne.s32.totalorder %s44, %s47
    %p56 = scmp.eq.s32.totalorder %s13, 1
    %p57 = por %p55, %p56
    %p58 = scmp.ne.s32.totalorder %s47, %s48
    %p59 = scmp.eq.s32.totalorder %s13, 0
    %p60 = por %p58, %p59
    %p61 = scmp.ne.s32.totalorder %s47, %s48
    %p62 = scmp.eq.s32.totalorder %s14, 1
    %p63 = por %p61, %p62
    %p65 = scmp.ne.s32.totalorder %s48, %s64
    %p66 = scmp.eq.s32.totalorder %s14, 0
    %p67 = por %p65, %p66
    %s68 = ssub.s32 %s8, %s15
    %p69 = scmp.eq.s32.totalorder %s68, 0
    %s71 = sadd.s32 %s70, 1
    %s72 = scalar_select %p69, %s70, %s71
    %p75 = pneg %p69
    %p76 = scmp.eq.s32.totalorder %s8, 1
    %p77 = por %p75, %p76
    %p78 = scmp.ne.s32.totalorder %s70, %s73
    %p79 = scmp.eq.s32.totalorder %s8, 0
    %p80 = por %p78, %p79
    %p81 = scmp.ne.s32.totalorder %s70, %s73
    %p82 = scmp.eq.s32.totalorder %s13, 1
    %p83 = por %p81, %p82
    %p84 = scmp.ne.s32.totalorder %s73, %s74
    %p85 = scmp.eq.s32.totalorder %s13, 0
    %p86 = por %p84, %p85
    %p87 = scmp.ne.s32.totalorder %s73, %s74
    %p88 = scmp.eq.s32.totalorder %s14, 1
    %p89 = por %p87, %p88
    %p91 = scmp.ne.s32.totalorder %s74, %s90
    %p92 = scmp.eq.s32.totalorder %s14, 0
    %p93 = por %p91, %p92
    %p94 = scmp.le.s32.totalorder 1, %s8
    %p95 = scmp.lt.s32.totalorder %s8, 3
    %p96 = pnand %p94, %p95
    %p97 = pneg %p96
    // Predicated region
    $region9: #{soft_position_embed.1} parent=5 // pred_check
      _
    $region10: #{soft_position_embed.1} parent=5 // pred_check_branch
      %99 = sbr.rel (%p96) target = $region12
    $region11: #{soft_position_embed.1} parent=5 // pred_region
      %s100 = ssub.s32 %s8, 1
    $region12: #{soft_position_embed.1} parent=5 // pred_fallthru
      _
    %p101 = scmp.lt.s32.totalorder %s8, 2
    // Predicated region
    $region13: #{soft_position_embed.1} parent=5 // pred_check
      %p102 = pneg %p101
    $region14: #{soft_position_embed.1} parent=5 // pred_check_branch
      %104 = sbr.rel (%p102) target = $region16
    $region15: #{soft_position_embed.1} parent=5 // pred_region
      // Predicated region
      $region17: #{soft_position_embed.1} parent=15 // pred_check
        %p105 = pneg %p28
      $region18: #{soft_position_embed.1} parent=15 // pred_check_branch
        %107 = sbr.rel (%p105) target = $region20
      $region19: #{soft_position_embed.1} parent=15 // pred_region
        %s108 = smul.u32 32, %s8
        %p109 = scmp.lt.s32.totalorder %s108, 63
        %s110 = scalar_select %p109, %s108, 63
        %s111 = scalar_lea.vmem %s0, %s110
        %s112 = smul.u32 32, %s8
      $region20: #{soft_position_embed.1} parent=15 // pred_fallthru
        _
      // Predicated region
      $region21: #{soft_position_embed.1} parent=15 // pred_check
        %p113 = pneg %p54
      $region22: #{soft_position_embed.1} parent=15 // pred_check_branch
        %115 = sbr.rel (%p113) target = $region24
      $region23: #{soft_position_embed.1} parent=15 // pred_region
        %s116 = smul.u32 32, %s8
        %p117 = scmp.lt.s32.totalorder %s116, 63
        %s118 = scalar_select %p117, %s116, 63
        %s119 = smul.addr %s118, 2
        %s120 = scalar_lea.vmem %s1, %s119
        %s121 = smul.u32 32, %s8
      $region24: #{soft_position_embed.1} parent=15 // pred_fallthru
        _
    $region16: #{soft_position_embed.1} parent=5 // pred_fallthru
      _
    %p122 = scmp.le.s32.totalorder 1, %s8
    %p123 = scmp.lt.s32.totalorder %s8, 3
    %p124 = pnand %p122, %p123
    %p125 = pneg %p124
    // Predicated region
    $region25: #{soft_position_embed.1} parent=5 // pred_check
      _
    $region26: #{soft_position_embed.1} parent=5 // pred_check_branch
      %127 = sbr.rel (%p124) target = $region28
    $region27: #{soft_position_embed.1} parent=5 // pred_region
      %s128 = ssub.s32 %s8, 1
      %s129 = smul.u32 32, %s13
      %p130 = scmp.lt.s32.totalorder %s129, 63
      %s131 = scalar_select %p130, %s129, 63
      %s132 = scalar_lea.vmem %s0, %s131
      %p133 = pneg %p34
      %p134 = pneg %p31
      %s135 = smul.u32 32, %s13
      %p136 = scmp.lt.s32.totalorder %s135, 63
      %s137 = scalar_select %p136, %s135, 63
      %s138 = smul.addr %s137, 2
      %s139 = scalar_lea.vmem %s1, %s138
      %p140 = pneg %p60
      %p141 = pneg %p57
      %p142 = pneg %p86
      %p143 = pneg %p83
      %s144 = smul.u32 32, %s13
      %p145 = scmp.lt.s32.totalorder %s144, 63
      %s146 = scalar_select %p145, %s144, 63
      %s147 = smul.addr %s146, 2
      %s148 = scalar_lea.vmem %s2, %s147
      %s149 = smul.u32 32, %s13
      %p150 = scmp.lt.s32.totalorder %s149, 63
      %s151 = scalar_select %p150, %s149, 63
      %s152 = scalar_lea.vmem %s0, %s151
      %s153 = smul.u32 32, %s13
      %s154 = smul.u32 32, %s13
      %p155 = scmp.lt.s32.totalorder %s154, 63
      %s156 = scalar_select %p155, %s154, 63
      %s157 = smul.addr %s156, 2
      %s158 = scalar_lea.vmem %s1, %s157
      %s159 = smul.u32 32, %s13
      %s160 = smul.u32 32, %s13
      %p161 = scmp.lt.s32.totalorder %s160, 63
      %s162 = scalar_select %p161, %s160, 63
      %s163 = smul.addr %s162, 2
      %s164 = scalar_lea.vmem %s2, %s163
      %s165 = smul.u32 32, %s13
      %v166 = vld [vmem:[%s158] sm:$0xff]
      %v167 = vld [vmem:[%s158 + $0x8] sm:$0xff]
      %v168 = vld [vmem:[%s158 + $0x10] sm:$0xff]
      %v169 = vld [vmem:[%s158 + $0x18] sm:$0xff]
      %v170 = vld [vmem:[%s158 + $0x20] sm:$0xff]
      %v171 = vld [vmem:[%s158 + $0x28] sm:$0xff]
      %v172 = vld [vmem:[%s158 + $0x30] sm:$0xff]
      %v173 = vld [vmem:[%s158 + $0x38] sm:$0xff]
      %v174 = vld [vmem:[%s152] sm:$0xff]
      %v175 = vld [vmem:[%s152 + $0x8] sm:$0xff]
      %v176 = vld [vmem:[%s152 + $0x10] sm:$0xff]
      %v177 = vld [vmem:[%s152 + $0x18] sm:$0xff]
      %v182 = vlaneseq
      %v183 = vshrl.u32 %v182, 7
      %v184 = vsub.s32 0, %v183
      %v185 = vrot.slane %v174, %v184
      %v186 = vlaneseq
      %v187 = vshrl.u32 %v186, 7
      %v188 = vsub.s32 1, %v187
      %v189 = vrot.slane %v174, %v188
      %v190 = vlaneseq
      %v191 = vshrl.u32 %v190, 7
      %v192 = vsub.s32 2, %v191
      %v193 = vrot.slane %v174, %v192
      %v194 = vlaneseq
      %v195 = vshrl.u32 %v194, 7
      %v196 = vsub.s32 3, %v195
      %v197 = vrot.slane %v174, %v196
      %v198 = vlaneseq
      %v199 = vshrl.u32 %v198, 7
      %v200 = vsub.s32 4, %v199
      %v201 = vrot.slane %v174, %v200
      %v202 = vlaneseq
      %v203 = vshrl.u32 %v202, 7
      %v204 = vsub.s32 5, %v203
      %v205 = vrot.slane %v174, %v204
      %v206 = vlaneseq
      %v207 = vshrl.u32 %v206, 7
      %v208 = vsub.s32 6, %v207
      %v209 = vrot.slane %v174, %v208
      %v210 = vlaneseq
      %v211 = vshrl.u32 %v210, 7
      %v212 = vsub.s32 7, %v211
      %v213 = vrot.slane %v174, %v212
      %v214 = vlaneseq
      %v215 = vshrl.u32 %v214, 7
      %v216 = vsub.s32 0, %v215
      %v217 = vrot.slane %v175, %v216
      %v218 = vlaneseq
      %v219 = vshrl.u32 %v218, 7
      %v220 = vsub.s32 1, %v219
      %v221 = vrot.slane %v175, %v220
      %v222 = vlaneseq
      %v223 = vshrl.u32 %v222, 7
      %v224 = vsub.s32 2, %v223
      %v225 = vrot.slane %v175, %v224
      %v226 = vlaneseq
      %v227 = vshrl.u32 %v226, 7
      %v228 = vsub.s32 3, %v227
      %v229 = vrot.slane %v175, %v228
      %v230 = vlaneseq
      %v231 = vshrl.u32 %v230, 7
      %v232 = vsub.s32 4, %v231
      %v233 = vrot.slane %v175, %v232
      %v234 = vlaneseq
      %v235 = vshrl.u32 %v234, 7
      %v236 = vsub.s32 5, %v235
      %v237 = vrot.slane %v175, %v236
      %v238 = vlaneseq
      %v239 = vshrl.u32 %v238, 7
      %v240 = vsub.s32 6, %v239
      %v241 = vrot.slane %v175, %v240
      %v242 = vlaneseq
      %v243 = vshrl.u32 %v242, 7
      %v244 = vsub.s32 7, %v243
      %v245 = vrot.slane %v175, %v244
      %v246 = vlaneseq
      %v247 = vshrl.u32 %v246, 7
      %v248 = vsub.s32 0, %v247
      %v249 = vrot.slane %v176, %v248
      %v250 = vlaneseq
      %v251 = vshrl.u32 %v250, 7
      %v252 = vsub.s32 1, %v251
      %v253 = vrot.slane %v176, %v252
      %v254 = vlaneseq
      %v255 = vshrl.u32 %v254, 7
      %v256 = vsub.s32 2, %v255
      %v257 = vrot.slane %v176, %v256
      %v258 = vlaneseq
      %v259 = vshrl.u32 %v258, 7
      %v260 = vsub.s32 3, %v259
      %v261 = vrot.slane %v176, %v260
      %v262 = vlaneseq
      %v263 = vshrl.u32 %v262, 7
      %v264 = vsub.s32 4, %v263
      %v265 = vrot.slane %v176, %v264
      %v266 = vlaneseq
      %v267 = vshrl.u32 %v266, 7
      %v268 = vsub.s32 5, %v267
      %v269 = vrot.slane %v176, %v268
      %v270 = vlaneseq
      %v271 = vshrl.u32 %v270, 7
      %v272 = vsub.s32 6, %v271
      %v273 = vrot.slane %v176, %v272
      %v274 = vlaneseq
      %v275 = vshrl.u32 %v274, 7
      %v276 = vsub.s32 7, %v275
      %v277 = vrot.slane %v176, %v276
      %v278 = vlaneseq
      %v279 = vshrl.u32 %v278, 7
      %v280 = vsub.s32 0, %v279
      %v281 = vrot.slane %v177, %v280
      %v282 = vlaneseq
      %v283 = vshrl.u32 %v282, 7
      %v284 = vsub.s32 1, %v283
      %v285 = vrot.slane %v177, %v284
      %v286 = vlaneseq
      %v287 = vshrl.u32 %v286, 7
      %v288 = vsub.s32 2, %v287
      %v289 = vrot.slane %v177, %v288
      %v290 = vlaneseq
      %v291 = vshrl.u32 %v290, 7
      %v292 = vsub.s32 3, %v291
      %v293 = vrot.slane %v177, %v292
      %v294 = vlaneseq
      %v295 = vshrl.u32 %v294, 7
      %v296 = vsub.s32 4, %v295
      %v297 = vrot.slane %v177, %v296
      %v298 = vlaneseq
      %v299 = vshrl.u32 %v298, 7
      %v300 = vsub.s32 5, %v299
      %v301 = vrot.slane %v177, %v300
      %v302 = vlaneseq
      %v303 = vshrl.u32 %v302, 7
      %v304 = vsub.s32 6, %v303
      %v305 = vrot.slane %v177, %v304
      %v306 = vlaneseq
      %v307 = vshrl.u32 %v306, 7
      %v308 = vsub.s32 7, %v307
      %v309 = vrot.slane %v177, %v308
      %v310 = vcombine.low %v185, %v189
      %v311 = vcombine.low %v193, %v197
      %v313 = vunpack.c.l.s4 1983009808
      %v314 = vunpack.c.0.s8 %v313
      %v315 = vlaneseq
      %v316 = vshrl.u32 %v315, 7
      %v317 = vsub.s32 %v314, %v316
      %v318 = vrot.slane %v310, %v317
      %v320 = vunpack.c.l.s4 1983009808
      %v321 = vunpack.c.0.s8 %v320
      %v322 = vlaneseq
      %v323 = vshrl.u32 %v322, 7
      %v324 = vsub.s32 %v321, %v323
      %v325 = vrot.slane %v311, %v324
      %v326 = vcombine.low %v318, %v325
      %v327 = vcombine.low %v201, %v205
      %v328 = vcombine.low %v209, %v213
      %v330 = vunpack.c.l.s4 1983009808
      %v331 = vunpack.c.0.s8 %v330
      %v332 = vlaneseq
      %v333 = vshrl.u32 %v332, 7
      %v334 = vsub.s32 %v331, %v333
      %v335 = vrot.slane %v327, %v334
      %v337 = vunpack.c.l.s4 1983009808
      %v338 = vunpack.c.0.s8 %v337
      %v339 = vlaneseq
      %v340 = vshrl.u32 %v339, 7
      %v341 = vsub.s32 %v338, %v340
      %v342 = vrot.slane %v328, %v341
      %v343 = vcombine.low %v335, %v342
      %v344 = vcombine.low %v217, %v221
      %v345 = vcombine.low %v225, %v229
      %v347 = vunpack.c.l.s4 1983009808
      %v348 = vunpack.c.0.s8 %v347
      %v349 = vlaneseq
      %v350 = vshrl.u32 %v349, 7
      %v351 = vsub.s32 %v348, %v350
      %v352 = vrot.slane %v344, %v351
      %v354 = vunpack.c.l.s4 1983009808
      %v355 = vunpack.c.0.s8 %v354
      %v356 = vlaneseq
      %v357 = vshrl.u32 %v356, 7
      %v358 = vsub.s32 %v355, %v357
      %v359 = vrot.slane %v345, %v358
      %v360 = vcombine.low %v352, %v359
      %v361 = vcombine.low %v233, %v237
      %v362 = vcombine.low %v241, %v245
      %v364 = vunpack.c.l.s4 1983009808
      %v365 = vunpack.c.0.s8 %v364
      %v366 = vlaneseq
      %v367 = vshrl.u32 %v366, 7
      %v368 = vsub.s32 %v365, %v367
      %v369 = vrot.slane %v361, %v368
      %v371 = vunpack.c.l.s4 1983009808
      %v372 = vunpack.c.0.s8 %v371
      %v373 = vlaneseq
      %v374 = vshrl.u32 %v373, 7
      %v375 = vsub.s32 %v372, %v374
      %v376 = vrot.slane %v362, %v375
      %v377 = vcombine.low %v369, %v376
      %v378 = vcombine.low %v249, %v253
      %v379 = vcombine.low %v257, %v261
      %v381 = vunpack.c.l.s4 1983009808
      %v382 = vunpack.c.0.s8 %v381
      %v383 = vlaneseq
      %v384 = vshrl.u32 %v383, 7
      %v385 = vsub.s32 %v382, %v384
      %v386 = vrot.slane %v378, %v385
      %v388 = vunpack.c.l.s4 1983009808
      %v389 = vunpack.c.0.s8 %v388
      %v390 = vlaneseq
      %v391 = vshrl.u32 %v390, 7
      %v392 = vsub.s32 %v389, %v391
      %v393 = vrot.slane %v379, %v392
      %v394 = vcombine.low %v386, %v393
      %v395 = vcombine.low %v265, %v269
      %v396 = vcombine.low %v273, %v277
      %v398 = vunpack.c.l.s4 1983009808
      %v399 = vunpack.c.0.s8 %v398
      %v400 = vlaneseq
      %v401 = vshrl.u32 %v400, 7
      %v402 = vsub.s32 %v399, %v401
      %v403 = vrot.slane %v395, %v402
      %v405 = vunpack.c.l.s4 1983009808
      %v406 = vunpack.c.0.s8 %v405
      %v407 = vlaneseq
      %v408 = vshrl.u32 %v407, 7
      %v409 = vsub.s32 %v406, %v408
      %v410 = vrot.slane %v396, %v409
      %v411 = vcombine.low %v403, %v410
      %v412 = vcombine.low %v281, %v285
      %v413 = vcombine.low %v289, %v293
      %v415 = vunpack.c.l.s4 1983009808
      %v416 = vunpack.c.0.s8 %v415
      %v417 = vlaneseq
      %v418 = vshrl.u32 %v417, 7
      %v419 = vsub.s32 %v416, %v418
      %v420 = vrot.slane %v412, %v419
      %v422 = vunpack.c.l.s4 1983009808
      %v423 = vunpack.c.0.s8 %v422
      %v424 = vlaneseq
      %v425 = vshrl.u32 %v424, 7
      %v426 = vsub.s32 %v423, %v425
      %v427 = vrot.slane %v413, %v426
      %v428 = vcombine.low %v420, %v427
      %v429 = vcombine.low %v297, %v301
      %v430 = vcombine.low %v305, %v309
      %v432 = vunpack.c.l.s4 1983009808
      %v433 = vunpack.c.0.s8 %v432
      %v434 = vlaneseq
      %v435 = vshrl.u32 %v434, 7
      %v436 = vsub.s32 %v433, %v435
      %v437 = vrot.slane %v429, %v436
      %v439 = vunpack.c.l.s4 1983009808
      %v440 = vunpack.c.0.s8 %v439
      %v441 = vlaneseq
      %v442 = vshrl.u32 %v441, 7
      %v443 = vsub.s32 %v440, %v442
      %v444 = vrot.slane %v430, %v443
      %v445 = vcombine.low %v437, %v444
      %v454 = vadd.f32 %v166, %v326
      %v455 = vadd.f32 %v167, %v343
      %v456 = vadd.f32 %v168, %v360
      %v457 = vadd.f32 %v169, %v377
      %v458 = vadd.f32 %v170, %v394
      %v459 = vadd.f32 %v171, %v411
      %v460 = vadd.f32 %v172, %v428
      %v461 = vadd.f32 %v173, %v445
      %462 = vst [vmem:[%s164] sm:$0xff] %v454
      %463 = vst [vmem:[%s164 + $0x8] sm:$0xff] %v455
      %464 = vst [vmem:[%s164 + $0x10] sm:$0xff] %v456
      %465 = vst [vmem:[%s164 + $0x18] sm:$0xff] %v457
      %466 = vst [vmem:[%s164 + $0x20] sm:$0xff] %v458
      %467 = vst [vmem:[%s164 + $0x28] sm:$0xff] %v459
      %468 = vst [vmem:[%s164 + $0x30] sm:$0xff] %v460
      %469 = vst [vmem:[%s164 + $0x38] sm:$0xff] %v461
      %s470 = smul.u32 32, %s13
      %p471 = scmp.lt.s32.totalorder %s470, 63
      %s472 = scalar_select %p471, %s470, 63
      %s473 = smul.addr %s472, 2
      %s474 = scalar_lea.vmem %s2, %s473
      // Predicated region
      $region29: #{soft_position_embed.1} parent=27 // pred_check
        %p475 = pneg %p83
      $region30: #{soft_position_embed.1} parent=27 // pred_check_branch
        %477 = sbr.rel (%p475) target = $region32
      $region31: #{soft_position_embed.1} parent=27 // pred_region
        %s478 = smul.u32 32, %s13
      $region32: #{soft_position_embed.1} parent=27 // pred_fallthru
        _
    $region28: #{soft_position_embed.1} parent=5 // pred_fallthru
      _
    %p479 = scmp.le.s32.totalorder 2, %s8
    // Predicated region
    $region33: #{soft_position_embed.1} parent=5 // pred_check
      %p480 = pneg %p479
    $region34: #{soft_position_embed.1} parent=5 // pred_check_branch
      %482 = sbr.rel (%p480) target = $region36
    $region35: #{soft_position_embed.1} parent=5 // pred_region
      %s483 = ssub.s32 %s8, 2
      // Predicated region
      $region37: #{soft_position_embed.1} parent=35 // pred_check
        %p484 = pneg %p89
      $region38: #{soft_position_embed.1} parent=35 // pred_check_branch
        %486 = sbr.rel (%p484) target = $region40
      $region39: #{soft_position_embed.1} parent=35 // pred_region
        %s487 = smul.u32 32, %s14
        %p488 = scmp.lt.s32.totalorder %s487, 63
        %s489 = scalar_select %p488, %s487, 63
        %s490 = smul.addr %s489, 2
        %s491 = scalar_lea.vmem %s2, %s490
      $region40: #{soft_position_embed.1} parent=35 // pred_fallthru
        _
    $region36: #{soft_position_embed.1} parent=5 // pred_fallthru
      _
  $region6: #{soft_position_embed.1} parent=0 // loop_footer
    %s12 = sadd.s32 1, %s8
  $region7: #{soft_position_embed.1} parent=0 // loop_footer_branch
    %7 = sbr.rel target = $region3
  $region8: #{soft_position_embed.1} parent=0 // loop_exit
    _

</llo_original>
